<compile_context>
chip_gen: v7x
topology: tpu7x:2x2x1
jax: 0.10.0
libtpu: 0.0.40
codegen_flags: <defaults>
</compile_context>

<pallas_src>
import functools
import math

import jax
import jax.numpy as jnp
from jax import lax
from jax.experimental import pallas as pl
from jax.experimental.pallas import tpu as pltpu


def _nce_kernel(*refs, shift, valid_b, needs_valid, has_keys):
    if has_keys:
        (e1_ref, e2_ref, kr_ref, kc_ref, loss_ref,
         rs_acc, rpc_acc, cs_acc, cpc_acc, ps_acc, rt_acc) = refs
    else:
        (e1_ref, e2_ref, loss_ref,
         rs_acc, rpc_acc, cs_acc, cpc_acc, ps_acc, rt_acc) = refs
        kr_ref = kc_ref = None

    i = pl.program_id(0)
    j = pl.program_id(1)
    ni = pl.num_programs(0)
    nj = pl.num_programs(1)
    tm = e1_ref.shape[0]
    tn = e2_ref.shape[0]

    # ---- init accumulators ---------------------------------------------------
    @pl.when(jnp.logical_and(i == 0, j == 0))
    def _():
        cs_acc[...] = jnp.zeros_like(cs_acc)
        cpc_acc[...] = jnp.zeros_like(cpc_acc)
        ps_acc[...] = jnp.zeros_like(ps_acc)
        rt_acc[...] = jnp.zeros_like(rt_acc)

    @pl.when(j == 0)
    def _():
        rs_acc[...] = jnp.zeros_like(rs_acc)
        rpc_acc[...] = jnp.zeros_like(rpc_acc)

    # ---- similarity tile on the MXU (bf16 in, f32 acc, contract dim 1) --------
    # e1 is pre-normalized * 1/T, e2 is pre-normalized; both already bf16.
    sim = lax.dot_general(e1_ref[...], e2_ref[...], (((1,), (1,)), ((), ())),
                          preferred_element_type=jnp.float32)          # (tm, tn)

    # ---- positive / valid masks built in-register (no BxB mask from HBM) ------
    if (not has_keys) or needs_valid:
        row_g = i * tm + lax.broadcasted_iota(jnp.int32, (tm, tn), 0)
        col_g = j * tn + lax.broadcasted_iota(jnp.int32, (tm, tn), 1)

    if has_keys:
        pos = kr_ref[...] == kc_ref[...]
    else:
        pos = row_g == col_g

    # exp with the known upper bound 1/T subtracted (|cos sim| <= 1).
    p = jnp.exp(sim - shift)
    if needs_valid:
        valid = jnp.logical_and(row_g < valid_b, col_g < valid_b)
        pos = jnp.logical_and(pos, valid)
        p = jnp.where(valid, p, 0.0)

    posf = pos.astype(jnp.float32)

    # ---- accumulate ------------------------------------------------------------
    rs_acc[...] += jnp.sum(p, axis=1, keepdims=True)                    # (tm, 1)
    rpc_acc[...] += jnp.sum(posf, axis=1, keepdims=True)                # (tm, 1)
    cs_acc[pl.ds(j, 1), :] += jnp.sum(p, axis=0, keepdims=True)         # (1, tn)
    cpc_acc[pl.ds(j, 1), :] += jnp.sum(posf, axis=0, keepdims=True)     # (1, tn)
    ps_tile = jnp.sum(jnp.where(pos, sim, 0.0), axis=1, keepdims=True)
    ps_acc[...] += jnp.sum(ps_tile, axis=0, keepdims=True)              # (1, 1)

    # ---- per-row-tile finalization (row log-sum term) --------------------------
    @pl.when(j == nj - 1)
    def _():
        rpc = rpc_acc[...]
        rs_safe = jnp.where(rpc > 0.0, rs_acc[...], 1.0)
        rt_acc[...] += jnp.sum(rpc * jnp.log(rs_safe), axis=0, keepdims=True)

    # ---- global finalization ----------------------------------------------------
    @pl.when(jnp.logical_and(i == ni - 1, j == nj - 1))
    def _():
        cpc = cpc_acc[...]
        cs_safe = jnp.where(cpc > 0.0, cs_acc[...], 1.0)
        col_term = jnp.sum(jnp.sum(cpc * jnp.log(cs_safe), axis=1, keepdims=True),
                           axis=0, keepdims=True)
        n_pos = jnp.sum(jnp.sum(cpc, axis=1, keepdims=True),
                        axis=0, keepdims=True)
        inv_np = 1.0 / n_pos
        # loss = (view1 + view2) / 2 in log-softmax form.
        loss_ref[...] = ((rt_acc[...] + col_term) * (0.5 * inv_np)
                         + shift - ps_acc[...] * inv_np)


def _round_up(x, m):
    return (x + m - 1) // m * m


def _l2_normalize(x):
    # torch.nn.functional.normalize: x / max(||x||_2, 1e-12)
    sq = jnp.sum(x * x, axis=1, keepdims=True)
    return x * jnp.minimum(lax.rsqrt(sq), 1e12)


def nce_loss(embeddings_v1, embeddings_v2, key_ids=None, temperature=0.1,
             block_m=512, block_n=256, vmem_limit_bytes=48 * 1024 * 1024):
    """JAX/Pallas equivalent of NCELoss.forward. Returns a scalar float32.

    block_m / block_n: row / column similarity tile sizes (multiples of 128).
    Larger block_m cuts HBM re-streaming of view-2; tiles are auto-shrunk to
    fit the VMEM budget so the defaults are safe on v5e / v6e / v7x.
    """
    b, d = embeddings_v1.shape
    assert embeddings_v2.shape == (b, d)
    inv_temp = float(1.0 / temperature)

    # ---- prologue (XLA): L2-normalize in f32, fold 1/T into view-1, cast bf16 --
    e1n = _l2_normalize(embeddings_v1.astype(jnp.float32)) * inv_temp
    e2n = _l2_normalize(embeddings_v2.astype(jnp.float32))

    dp = _round_up(d, 128)
    bp_min = _round_up(b, 128)
    tm = min(block_m, bp_min)
    tn = min(block_n, bp_min)

    # Shrink tiles so double-buffered bf16 streams + f32 tile temporaries stay
    # inside a conservative fraction of the scoped-VMEM limit.
    budget = int(vmem_limit_bytes * 0.75)

    def _est(m, n):
        return 2 * 2 * (m + n) * dp * 2 + 8 * m * n * 4

    while _est(tm, tn) > budget and tm > 128:
        tm = max(128, tm // 2)
    while _est(tm, tn) > budget and tn > 128:
        tn = max(128, tn // 2)

    bp = _round_up(b, math.lcm(tm, tn))
    n_i, n_j = bp // tm, bp // tn
    needs_valid = bp != b
    has_keys = key_ids is not None

    e1p = jnp.pad(e1n.astype(jnp.bfloat16), ((0, bp - b), (0, dp - d)))
    e2p = jnp.pad(e2n.astype(jnp.bfloat16), ((0, bp - b), (0, dp - d)))

    inputs = [e1p, e2p]
    in_specs = [
        pl.BlockSpec((tm, dp), lambda i, j: (i, 0)),   # view-1 row tile (resident over j)
        pl.BlockSpec((tn, dp), lambda i, j: (j, 0)),   # view-2 col tile (streamed)
    ]
    if has_keys:
        keys = jnp.pad(jnp.asarray(key_ids).astype(jnp.int32), (0, bp - b))
        inputs += [keys.reshape(bp, 1), keys.reshape(1, bp)]
        in_specs += [
            pl.BlockSpec((tm, 1), lambda i, j: (i, 0)),   # keys (rows)
            pl.BlockSpec((1, tn), lambda i, j: (0, j)),   # keys (cols)
        ]

    kernel = functools.partial(_nce_kernel, shift=inv_temp, valid_b=b,
                               needs_valid=needs_valid, has_keys=has_keys)

    loss = pl.pallas_call(
        kernel,
        out_shape=jax.ShapeDtypeStruct((1, 1), jnp.float32),
        grid_spec=pltpu.PrefetchScalarGridSpec(
            num_scalar_prefetch=0,
            grid=(n_i, n_j),
            in_specs=in_specs,
            out_specs=pl.BlockSpec((1, 1), lambda i, j: (0, 0)),
            scratch_shapes=[
                pltpu.VMEM((tm, 1), jnp.float32),      # row sums        (reset at j==0)
                pltpu.VMEM((tm, 1), jnp.float32),      # row pos counts  (reset at j==0)
                pltpu.VMEM((n_j, tn), jnp.float32),    # col sums        (persist over grid)
                pltpu.VMEM((n_j, tn), jnp.float32),    # col pos counts  (persist over grid)
                pltpu.VMEM((1, 1), jnp.float32),       # sum of sim over positives
                pltpu.VMEM((1, 1), jnp.float32),       # sum_i rpc_i * log(rowsum_i)
            ],
        ),
        compiler_params=pltpu.CompilerParams(
            # TODO(synk): per-core column partials would let axis 0 be "parallel"
            # so v7x's second TensorCore is used; neutral on v5e/v6e.
            dimension_semantics=("arbitrary", "arbitrary"),
            vmem_limit_bytes=vmem_limit_bytes,
        ),
    )(*inputs)
    return loss[0, 0]


def _reference(e1, e2, key_ids, temperature):
    """Pure-JAX port of the PyTorch module (f32 throughout)."""
    n1 = e1 / jnp.maximum(jnp.linalg.norm(e1, axis=1, keepdims=True), 1e-12)
    n2 = e2 / jnp.maximum(jnp.linalg.norm(e2, axis=1, keepdims=True), 1e-12)
    sim = n1 @ n2.T / temperature
    se = jnp.exp(sim)
    if key_ids is None:
        pm = jnp.eye(e1.shape[0], dtype=bool)
    else:
        pm = key_ids[:, None] == key_ids[None, :]
    v1 = -jnp.mean(jnp.log(se / jnp.sum(se, axis=1, keepdims=True))[pm])
    v2 = -jnp.mean(jnp.log(se / jnp.sum(se, axis=0, keepdims=True))[pm])
    return (v1 + v2) / 2


if __name__ == "__main__":
    key = jax.random.PRNGKey(0)
    k1, k2 = jax.random.split(key)

    B, D = 8, 32
    emb_v1 = jax.random.normal(k1, (B, D), dtype=jnp.float32)
    emb_v2 = jax.random.normal(k2, (B, D), dtype=jnp.float32)

    # Case 1: default identity positives (each sample positive only with itself).
    loss = nce_loss(emb_v1, emb_v2, key_ids=None, temperature=0.1)
    jax.block_until_ready(loss)
    ref = _reference(emb_v1, emb_v2, None, 0.1)
    assert jnp.allclose(loss, ref, rtol=5e-2, atol=1e-1), (loss, ref)

    # Case 2: grouped positives via key_ids.
    kid = jnp.array([0, 0, 1, 1, 2, 2, 3, 3], dtype=jnp.int32)
    loss2 = nce_loss(emb_v1, emb_v2, key_ids=kid, temperature=0.1)
    jax.block_until_ready(loss2)
    ref2 = _reference(emb_v1, emb_v2, kid, 0.1)
    assert jnp.allclose(loss2, ref2, rtol=5e-2, atol=1e-1), (loss2, ref2)

    print("KERNEL_OK")
</pallas_src>

<mosaic_0001>
module attributes {stable_mosaic.version = 11 : i64} {
  func.func @_nce_kernel(%arg0: i32, %arg1: i32, %arg2: memref<128x128xbf16, #tpu.memory_space<vmem>>, %arg3: memref<128x128xbf16, #tpu.memory_space<vmem>>, %arg4: memref<1x1xf32, #tpu.memory_space<vmem>>, %arg5: memref<128x1xf32, #tpu.memory_space<vmem>>, %arg6: memref<128x1xf32, #tpu.memory_space<vmem>>, %arg7: memref<1x128xf32, #tpu.memory_space<vmem>>, %arg8: memref<1x128xf32, #tpu.memory_space<vmem>>, %arg9: memref<1x1xf32, #tpu.memory_space<vmem>>, %arg10: memref<1x1xf32, #tpu.memory_space<vmem>>) attributes {dimension_semantics = [#tpu.dimension_semantics<arbitrary>, #tpu.dimension_semantics<arbitrary>], iteration_bounds = array<i64: 1, 1>, scalar_prefetch = 0 : i64, scratch_operands = 6 : i64, tpu.core_type = #tpu.core_type<tc>, window_params = [{transform_indices = @transform_0, window_bounds = array<i64: 128, 128>}, {transform_indices = @transform_1, window_bounds = array<i64: 128, 128>}, {pipeline_mode = #tpu.pipeline_mode<synchronous>, transform_indices = @transform_2, window_bounds = array<i64: 1, 1>}]} {
    %c0_i32 = arith.constant 0 : i32
    %0 = arith.cmpi eq, %arg0, %c0_i32 : i32
    %c0_i32_0 = arith.constant 0 : i32
    %1 = arith.cmpi eq, %arg1, %c0_i32_0 : i32
    %2 = arith.andi %0, %1 : i1
    %3 = arith.extui %2 : i1 to i32
    %c0_i32_1 = arith.constant 0 : i32
    %4 = arith.cmpi ne, %3, %c0_i32_1 : i32
    scf.if %4 {
      %cst_39 = arith.constant 0.000000e+00 : f32
      %74 = vector.broadcast %cst_39 : f32 to vector<1x128xf32>
      %c0_40 = arith.constant 0 : index
      %c0_41 = arith.constant 0 : index
      %75 = vector.load %arg7[%c0_40, %c0_41] : memref<1x128xf32, #tpu.memory_space<vmem>>, vector<1x128xf32>
      tpu.vector_store %arg7[%c0_40, %c0_41], %74 {strides = array<i32>} : memref<1x128xf32, #tpu.memory_space<vmem>>, vector<1x128xf32>,
      %cst_42 = arith.constant 0.000000e+00 : f32
      %76 = vector.broadcast %cst_42 : f32 to vector<1x128xf32>
      %c0_43 = arith.constant 0 : index
      %c0_44 = arith.constant 0 : index
      %77 = vector.load %arg8[%c0_43, %c0_44] : memref<1x128xf32, #tpu.memory_space<vmem>>, vector<1x128xf32>
      tpu.vector_store %arg8[%c0_43, %c0_44], %76 {strides = array<i32>} : memref<1x128xf32, #tpu.memory_space<vmem>>, vector<1x128xf32>,
      %cst_45 = arith.constant 0.000000e+00 : f32
      %78 = vector.broadcast %cst_45 : f32 to vector<1x1xf32>
      %c0_46 = arith.constant 0 : index
      %c0_47 = arith.constant 0 : index
      %79 = vector.load %arg9[%c0_46, %c0_47] : memref<1x1xf32, #tpu.memory_space<vmem>>, vector<1x1xf32>
      tpu.vector_store %arg9[%c0_46, %c0_47], %78 {strides = array<i32>} : memref<1x1xf32, #tpu.memory_space<vmem>>, vector<1x1xf32>,
      %cst_48 = arith.constant 0.000000e+00 : f32
      %80 = vector.broadcast %cst_48 : f32 to vector<1x1xf32>
      %c0_49 = arith.constant 0 : index
      %c0_50 = arith.constant 0 : index
      %81 = vector.load %arg10[%c0_49, %c0_50] : memref<1x1xf32, #tpu.memory_space<vmem>>, vector<1x1xf32>
      tpu.vector_store %arg10[%c0_49, %c0_50], %80 {strides = array<i32>} : memref<1x1xf32, #tpu.memory_space<vmem>>, vector<1x1xf32>,
    } else {
    }
    %c0_i32_2 = arith.constant 0 : i32
    %5 = arith.cmpi eq, %arg1, %c0_i32_2 : i32
    %6 = arith.extui %5 : i1 to i32
    %c0_i32_3 = arith.constant 0 : i32
    %7 = arith.cmpi ne, %6, %c0_i32_3 : i32
    scf.if %7 {
      %cst_39 = arith.constant 0.000000e+00 : f32
      %74 = vector.broadcast %cst_39 : f32 to vector<128x1xf32>
      %c0_40 = arith.constant 0 : index
      %c0_41 = arith.constant 0 : index
      %75 = vector.load %arg5[%c0_40, %c0_41] : memref<128x1xf32, #tpu.memory_space<vmem>>, vector<128x1xf32>
      tpu.vector_store %arg5[%c0_40, %c0_41], %74 {strides = array<i32>} : memref<128x1xf32, #tpu.memory_space<vmem>>, vector<128x1xf32>,
      %cst_42 = arith.constant 0.000000e+00 : f32
      %76 = vector.broadcast %cst_42 : f32 to vector<128x1xf32>
      %c0_43 = arith.constant 0 : index
      %c0_44 = arith.constant 0 : index
      %77 = vector.load %arg6[%c0_43, %c0_44] : memref<128x1xf32, #tpu.memory_space<vmem>>, vector<128x1xf32>
      tpu.vector_store %arg6[%c0_43, %c0_44], %76 {strides = array<i32>} : memref<128x1xf32, #tpu.memory_space<vmem>>, vector<128x1xf32>,
    } else {
    }
    %c0 = arith.constant 0 : index
    %c0_4 = arith.constant 0 : index
    %8 = vector.load %arg2[%c0, %c0_4] : memref<128x128xbf16, #tpu.memory_space<vmem>>, vector<128x128xbf16>
    %c0_5 = arith.constant 0 : index
    %c0_6 = arith.constant 0 : index
    %9 = vector.load %arg3[%c0_5, %c0_6] : memref<128x128xbf16, #tpu.memory_space<vmem>>, vector<128x128xbf16>
    %cst = arith.constant dense<0.000000e+00> : vector<128x128xf32>
    %10 = tpu.matmul %8, %9, %cst {dimension_numbers = #tpu.dot_dimension_numbers<[1], [1], [0], [0], [0, 0, 1, 0], [], []>} : vector<128x128xbf16>, vector<128x128xbf16>, vector<128x128xf32> -> vector<128x128xf32>
    %c128_i32 = arith.constant 128 : i32
    %11 = arith.muli %arg0, %c128_i32 : i32
    %12 = tpu.iota {dimensions = array<i32: 0>} : vector<128x128xi32>
    %13 = vector.broadcast %11 : i32 to vector<128x128xi32>
    %14 = arith.addi %13, %12 : vector<128x128xi32>
    %c128_i32_7 = arith.constant 128 : i32
    %15 = arith.muli %arg1, %c128_i32_7 : i32
    %16 = tpu.iota {dimensions = array<i32: 1>} : vector<128x128xi32>
    %17 = vector.broadcast %15 : i32 to vector<128x128xi32>
    %18 = arith.addi %17, %16 : vector<128x128xi32>
    %19 = arith.cmpi eq, %14, %18 : vector<128x128xi32>
    %cst_8 = arith.constant 1.000000e+01 : f32
    %20 = vector.broadcast %cst_8 : f32 to vector<128x128xf32>
    %21 = arith.subf %10, %20 : vector<128x128xf32>
    %22 = math.exp %21 : vector<128x128xf32>
    %c8_i32 = arith.constant 8 : i32
    %23 = vector.broadcast %c8_i32 : i32 to vector<128x128xi32>
    %24 = arith.cmpi slt, %14, %23 : vector<128x128xi32>
    %c8_i32_9 = arith.constant 8 : i32
    %25 = vector.broadcast %c8_i32_9 : i32 to vector<128x128xi32>
    %26 = arith.cmpi slt, %18, %25 : vector<128x128xi32>
    %27 = arith.andi %24, %26 : vector<128x128xi1>
    %28 = arith.andi %19, %27 : vector<128x128xi1>
    %cst_10 = arith.constant 0.000000e+00 : f32
    %29 = vector.broadcast %cst_10 : f32 to vector<128x128xf32>
    %30 = arith.select %27, %22, %29 : vector<128x128xi1>, vector<128x128xf32>
    %31 = arith.extui %28 : vector<128x128xi1> to vector<128x128xi32>
    %32 = arith.sitofp %31 : vector<128x128xi32> to vector<128x128xf32>
    %c0_11 = arith.constant 0 : index
    %c0_12 = arith.constant 0 : index
    %33 = vector.load %arg5[%c0_11, %c0_12] : memref<128x1xf32, #tpu.memory_space<vmem>>, vector<128x1xf32>
    %cst_13 = arith.constant dense<0.000000e+00> : vector<128xf32>
    %34 = vector.multi_reduction <add>, %30, %cst_13 [1] : vector<128x128xf32> to vector<128xf32>
    %35 = vector.shape_cast %34 : vector<128xf32> to vector<128x1xf32>
    %36 = arith.addf %33, %35 : vector<128x1xf32>
    %c0_14 = arith.constant 0 : index
    %c0_15 = arith.constant 0 : index
    %37 = vector.load %arg5[%c0_14, %c0_15] : memref<128x1xf32, #tpu.memory_space<vmem>>, vector<128x1xf32>
    tpu.vector_store %arg5[%c0_14, %c0_15], %36 {strides = array<i32>} : memref<128x1xf32, #tpu.memory_space<vmem>>, vector<128x1xf32>,
    %c0_16 = arith.constant 0 : index
    %c0_17 = arith.constant 0 : index
    %38 = vector.load %arg6[%c0_16, %c0_17] : memref<128x1xf32, #tpu.memory_space<vmem>>, vector<128x1xf32>
    %cst_18 = arith.constant dense<0.000000e+00> : vector<128xf32>
    %39 = vector.multi_reduction <add>, %32, %cst_18 [1] : vector<128x128xf32> to vector<128xf32>
    %40 = vector.shape_cast %39 : vector<128xf32> to vector<128x1xf32>
    %41 = arith.addf %38, %40 : vector<128x1xf32>
    %c0_19 = arith.constant 0 : index
    %c0_20 = arith.constant 0 : index
    %42 = vector.load %arg6[%c0_19, %c0_20] : memref<128x1xf32, #tpu.memory_space<vmem>>, vector<128x1xf32>
    tpu.vector_store %arg6[%c0_19, %c0_20], %41 {strides = array<i32>} : memref<128x1xf32, #tpu.memory_space<vmem>>, vector<128x1xf32>,
    %43 = arith.index_cast %arg1 : i32 to index
    %c0_21 = arith.constant 0 : index
    %44 = vector.load %arg7[%43, %c0_21] : memref<1x128xf32, #tpu.memory_space<vmem>>, vector<1x128xf32>
    %cst_22 = arith.constant dense<0.000000e+00> : vector<128xf32>
    %45 = vector.multi_reduction <add>, %30, %cst_22 [0] : vector<128x128xf32> to vector<128xf32>
    %46 = vector.shape_cast %45 : vector<128xf32> to vector<1x128xf32>
    %47 = arith.addf %44, %46 : vector<1x128xf32>
    %48 = arith.index_cast %arg1 : i32 to index
    %c0_23 = arith.constant 0 : index
    %49 = vector.load %arg7[%48, %c0_23] : memref<1x128xf32, #tpu.memory_space<vmem>>, vector<1x128xf32>
    tpu.vector_store %arg7[%48, %c0_23], %47 {strides = array<i32>} : memref<1x128xf32, #tpu.memory_space<vmem>>, vector<1x128xf32>,
    %50 = arith.index_cast %arg1 : i32 to index
    %c0_24 = arith.constant 0 : index
    %51 = vector.load %arg8[%50, %c0_24] : memref<1x128xf32, #tpu.memory_space<vmem>>, vector<1x128xf32>
    %cst_25 = arith.constant dense<0.000000e+00> : vector<128xf32>
    %52 = vector.multi_reduction <add>, %32, %cst_25 [0] : vector<128x128xf32> to vector<128xf32>
    %53 = vector.shape_cast %52 : vector<128xf32> to vector<1x128xf32>
    %54 = arith.addf %51, %53 : vector<1x128xf32>
    %55 = arith.index_cast %arg1 : i32 to index
    %c0_26 = arith.constant 0 : index
    %56 = vector.load %arg8[%55, %c0_26] : memref<1x128xf32, #tpu.memory_space<vmem>>, vector<1x128xf32>
    tpu.vector_store %arg8[%55, %c0_26], %54 {strides = array<i32>} : memref<1x128xf32, #tpu.memory_space<vmem>>, vector<1x128xf32>,
    %cst_27 = arith.constant 0.000000e+00 : f32
    %57 = vector.broadcast %cst_27 : f32 to vector<128x128xf32>
    %58 = arith.select %28, %10, %57 : vector<128x128xi1>, vector<128x128xf32>
    %cst_28 = arith.constant dense<0.000000e+00> : vector<128xf32>
    %59 = vector.multi_reduction <add>, %58, %cst_28 [1] : vector<128x128xf32> to vector<128xf32>
    %60 = vector.shape_cast %59 : vector<128xf32> to vector<128x1xf32>
    %c0_29 = arith.constant 0 : index
    %c0_30 = arith.constant 0 : index
    %61 = vector.load %arg9[%c0_29, %c0_30] : memref<1x1xf32, #tpu.memory_space<vmem>>, vector<1x1xf32>
    %cst_31 = arith.constant dense<0.000000e+00> : vector<1xf32>
    %62 = vector.multi_reduction <add>, %60, %cst_31 [0] : vector<128x1xf32> to vector<1xf32>
    %63 = vector.shape_cast %62 : vector<1xf32> to vector<1x1xf32>
    %64 = arith.addf %61, %63 : vector<1x1xf32>
    %c0_32 = arith.constant 0 : index
    %c0_33 = arith.constant 0 : index
    %65 = vector.load %arg9[%c0_32, %c0_33] : memref<1x1xf32, #tpu.memory_space<vmem>>, vector<1x1xf32>
    tpu.vector_store %arg9[%c0_32, %c0_33], %64 {strides = array<i32>} : memref<1x1xf32, #tpu.memory_space<vmem>>, vector<1x1xf32>,
    %c0_i32_34 = arith.constant 0 : i32
    %66 = arith.cmpi eq, %arg1, %c0_i32_34 : i32
    %67 = arith.extui %66 : i1 to i32
    %c0_i32_35 = arith.constant 0 : i32
    %68 = arith.cmpi ne, %67, %c0_i32_35 : i32
    scf.if %68 {
      %c0_39 = arith.constant 0 : index
      %c0_40 = arith.constant 0 : index
      %74 = vector.load %arg6[%c0_39, %c0_40] : memref<128x1xf32, #tpu.memory_space<vmem>>, vector<128x1xf32>
      %cst_41 = arith.constant 0.000000e+00 : f32
      %75 = vector.broadcast %cst_41 : f32 to vector<128x1xf32>
      %76 = arith.cmpf ogt, %74, %75 : vector<128x1xf32>
      %c0_42 = arith.constant 0 : index
      %c0_43 = arith.constant 0 : index
      %77 = vector.load %arg5[%c0_42, %c0_43] : memref<128x1xf32, #tpu.memory_space<vmem>>, vector<128x1xf32>
      %cst_44 = arith.constant 1.000000e+00 : f32
      %78 = vector.broadcast %cst_44 : f32 to vector<128x1xf32>
      %79 = arith.select %76, %77, %78 : vector<128x1xi1>, vector<128x1xf32>
      %c0_45 = arith.constant 0 : index
      %c0_46 = arith.constant 0 : index
      %80 = vector.load %arg10[%c0_45, %c0_46] : memref<1x1xf32, #tpu.memory_space<vmem>>, vector<1x1xf32>
      %81 = math.log %79 : vector<128x1xf32>
      %82 = arith.mulf %74, %81 : vector<128x1xf32>
      %cst_47 = arith.constant dense<0.000000e+00> : vector<1xf32>
      %83 = vector.multi_reduction <add>, %82, %cst_47 [0] : vector<128x1xf32> to vector<1xf32>
      %84 = vector.shape_cast %83 : vector<1xf32> to vector<1x1xf32>
      %85 = arith.addf %80, %84 : vector<1x1xf32>
      %c0_48 = arith.constant 0 : index
      %c0_49 = arith.constant 0 : index
      %86 = vector.load %arg10[%c0_48, %c0_49] : memref<1x1xf32, #tpu.memory_space<vmem>>, vector<1x1xf32>
      tpu.vector_store %arg10[%c0_48, %c0_49], %85 {strides = array<i32>} : memref<1x1xf32, #tpu.memory_space<vmem>>, vector<1x1xf32>,
    } else {
    }
    %c0_i32_36 = arith.constant 0 : i32
    %69 = arith.cmpi eq, %arg0, %c0_i32_36 : i32
    %c0_i32_37 = arith.constant 0 : i32
    %70 = arith.cmpi eq, %arg1, %c0_i32_37 : i32
    %71 = arith.andi %69, %70 : i1
    %72 = arith.extui %71 : i1 to i32
    %c0_i32_38 = arith.constant 0 : i32
    %73 = arith.cmpi ne, %72, %c0_i32_38 : i32
    scf.if %73 {
      %c0_39 = arith.constant 0 : index
      %c0_40 = arith.constant 0 : index
      %74 = vector.load %arg8[%c0_39, %c0_40] : memref<1x128xf32, #tpu.memory_space<vmem>>, vector<1x128xf32>
      %cst_41 = arith.constant 0.000000e+00 : f32
      %75 = vector.broadcast %cst_41 : f32 to vector<1x128xf32>
      %76 = arith.cmpf ogt, %74, %75 : vector<1x128xf32>
      %c0_42 = arith.constant 0 : index
      %c0_43 = arith.constant 0 : index
      %77 = vector.load %arg7[%c0_42, %c0_43] : memref<1x128xf32, #tpu.memory_space<vmem>>, vector<1x128xf32>
      %cst_44 = arith.constant 1.000000e+00 : f32
      %78 = vector.broadcast %cst_44 : f32 to vector<1x128xf32>
      %79 = arith.select %76, %77, %78 : vector<1x128xi1>, vector<1x128xf32>
      %80 = math.log %79 : vector<1x128xf32>
      %81 = arith.mulf %74, %80 : vector<1x128xf32>
      %cst_45 = arith.constant dense<0.000000e+00> : vector<1xf32>
      %82 = vector.multi_reduction <add>, %81, %cst_45 [1] : vector<1x128xf32> to vector<1xf32>
      %83 = vector.shape_cast %82 : vector<1xf32> to vector<1x1xf32>
      %cst_46 = arith.constant dense<0.000000e+00> : vector<1xf32>
      %84 = vector.multi_reduction <add>, %83, %cst_46 [0] : vector<1x1xf32> to vector<1xf32>
      %85 = vector.shape_cast %84 : vector<1xf32> to vector<1x1xf32>
      %cst_47 = arith.constant dense<0.000000e+00> : vector<1xf32>
      %86 = vector.multi_reduction <add>, %74, %cst_47 [1] : vector<1x128xf32> to vector<1xf32>
      %87 = vector.shape_cast %86 : vector<1xf32> to vector<1x1xf32>
      %cst_48 = arith.constant dense<0.000000e+00> : vector<1xf32>
      %88 = vector.multi_reduction <add>, %87, %cst_48 [0] : vector<1x1xf32> to vector<1xf32>
      %89 = vector.shape_cast %88 : vector<1xf32> to vector<1x1xf32>
      %cst_49 = arith.constant 1.000000e+00 : f32
      %90 = vector.broadcast %cst_49 : f32 to vector<1x1xf32>
      %91 = arith.divf %90, %89 : vector<1x1xf32>
      %c0_50 = arith.constant 0 : index
      %c0_51 = arith.constant 0 : index
      %92 = vector.load %arg10[%c0_50, %c0_51] : memref<1x1xf32, #tpu.memory_space<vmem>>, vector<1x1xf32>
      %93 = arith.addf %92, %85 : vector<1x1xf32>
      %cst_52 = arith.constant 5.000000e-01 : f32
      %94 = vector.broadcast %cst_52 : f32 to vector<1x1xf32>
      %95 = arith.mulf %94, %91 : vector<1x1xf32>
      %96 = arith.mulf %93, %95 : vector<1x1xf32>
      %cst_53 = arith.constant 1.000000e+01 : f32
      %97 = vector.broadcast %cst_53 : f32 to vector<1x1xf32>
      %98 = arith.addf %96, %97 : vector<1x1xf32>
      %c0_54 = arith.constant 0 : index
      %c0_55 = arith.constant 0 : index
      %99 = vector.load %arg9[%c0_54, %c0_55] : memref<1x1xf32, #tpu.memory_space<vmem>>, vector<1x1xf32>
      %100 = arith.mulf %99, %91 : vector<1x1xf32>
      %101 = arith.subf %98, %100 : vector<1x1xf32>
      %c0_56 = arith.constant 0 : index
      %c0_57 = arith.constant 0 : index
      %102 = vector.load %arg4[%c0_56, %c0_57] : memref<1x1xf32, #tpu.memory_space<vmem>>, vector<1x1xf32>
      tpu.vector_store %arg4[%c0_56, %c0_57], %101 {strides = array<i32>} : memref<1x1xf32, #tpu.memory_space<vmem>>, vector<1x1xf32>,
    } else {
    }
    return
  }
  func.func @transform_0(%arg0: i32, %arg1: i32) -> (i32, i32) {
    %c0_i32 = arith.constant 0 : i32
    %c0_i32_0 = arith.constant 0 : i32
    return %arg0, %c0_i32 : i32, i32
  }
  func.func @transform_1(%arg0: i32, %arg1: i32) -> (i32, i32) {
    %c0_i32 = arith.constant 0 : i32
    %c0_i32_0 = arith.constant 0 : i32
    return %arg1, %c0_i32 : i32, i32
  }
  func.func @transform_2(%arg0: i32, %arg1: i32) -> (i32, i32) {
    %c0_i32 = arith.constant 0 : i32
    %c0_i32_0 = arith.constant 0 : i32
    %c0_i32_1 = arith.constant 0 : i32
    return %c0_i32, %c0_i32_0 : i32, i32
  }
}

</mosaic_0001>

<llo_original>
// kernel: tpu_custom_call.1
$region0: #{tpu_custom_call.1}
  #allocation0 [shape = 'u32[]', space=smem, size = 0x4, offset = 0x4, fixed_abs, tag = 'smem constant byte address 0x4 - core index']
  #allocation1 [shape = 'u32[144,128]{1,0:T(1,128)}', space=vmem, size = 0x12000, scoped, tag = 'internal scratch']
  #allocation2 [shape = 'f32[128,1]{1,0:T(8,128)}', space=vmem, size = 0x10000, scoped, tag = 'scratch operand']
  #allocation3 [shape = 'f32[128,1]{1,0:T(8,128)}', space=vmem, size = 0x10000, scoped, tag = 'scratch operand']
  #allocation4 [shape = 'f32[1,128]{1,0:T(1,128)}', space=vmem, size = 0x200, scoped, tag = 'scratch operand']
  #allocation5 [shape = 'f32[1,128]{1,0:T(1,128)}', space=vmem, size = 0x200, scoped, tag = 'scratch operand']
  #allocation6 [shape = 'f32[1,1]{1,0:T(1,128)}', space=vmem, size = 0x200, scoped, tag = 'scratch operand']
  #allocation7 [shape = 'f32[1,1]{1,0:T(1,128)}', space=vmem, size = 0x200, scoped, tag = 'scratch operand']
  %s0 = inlined_call_operand.hbm [shape: bf16[128,128], index: 0, kind: input, shape index: {}]
  %s1 = inlined_call_operand.hbm [shape: bf16[128,128], index: 1, kind: input, shape index: {}]
  %s2 = inlined_call_operand.hbm [shape: f32[1,1], index: 2, kind: output, shape index: {}]
  %s3 = sld [smem:[#allocation0]]
  $region42: #{tpu_custom_call.1} parent=0
    _
  %s5 = ssub.s32 1, %s3
  %s6 = scalar_select 0, %s5, %s3
  $region1: #{tpu_custom_call.1} parent=0
    #allocation8 [shape = 'u8[32768]{0}', space=vmem, size = 0x8000, scoped, tag = 'input window, operand 0, single buffered']
    #allocation9 [shape = 's32[1]{0}', space=sflag, size = 0x4, scoped, tag = 'scoped memory for tpu_custom_call.1']
    #allocation10 [shape = 's32[1]{0}', space=sflag, size = 0x4, scoped, tag = 'scoped memory for tpu_custom_call.1']
    #allocation11 [shape = 'u8[32768]{0}', space=vmem, size = 0x8000, scoped, tag = 'input window, operand 1, single buffered']
    #allocation12 [shape = 's32[1]{0}', space=sflag, size = 0x4, scoped, tag = 'scoped memory for tpu_custom_call.1']
    #allocation13 [shape = 'u8[512]{0}', space=vmem, size = 0x400, scoped, tag = 'output window, operand 0, single buffered']
    %7 = vsyncpa [#allocation9], 0
    %8 = vsyncpa [#allocation12], 0
    %9 = vsyncpa [#allocation10], 0
    // Predicated region
    $region2: #{tpu_custom_call.1} parent=1 // pred_check
      _
    $region3: #{tpu_custom_call.1} parent=1 // pred_check_branch
      %11 = sbr.rel (0) target = $region5
    $region4: #{tpu_custom_call.1} parent=1 // pred_region
      %s13 = ssub.s32 1024, 1024
      %14 = vsyncadd [#allocation9], %s13
      %s15 = sshll.u32 [#allocation8], 4
      %s16 = int_to_ptr.vmem [resolvable:$true] %s15
      %21 = dma.hbm_to_vmem [thread:$0]  %s0, 1024, %s16, [#allocation9], 64, 64, 4
    $region5: #{tpu_custom_call.1} parent=1 // pred_fallthru
      _
    // Predicated region
    $region6: #{tpu_custom_call.1} parent=1 // pred_check
      _
    $region7: #{tpu_custom_call.1} parent=1 // pred_check_branch
      %23 = sbr.rel (0) target = $region9
    $region8: #{tpu_custom_call.1} parent=1 // pred_region
      %s25 = ssub.s32 1024, 1024
      %26 = vsyncadd [#allocation12], %s25
      %s27 = sshll.u32 [#allocation11], 4
      %s28 = int_to_ptr.vmem [resolvable:$true] %s27
      %33 = dma.hbm_to_vmem [thread:$0]  %s1, 1024, %s28, [#allocation12], 64, 64, 4
    $region9: #{tpu_custom_call.1} parent=1 // pred_fallthru
      _
    // Predicated region
    $region10: #{tpu_custom_call.1} parent=1 // pred_check
      _
    $region11: #{tpu_custom_call.1} parent=1 // pred_check_branch
      %35 = sbr.rel (0) target = $region13
    $region12: #{tpu_custom_call.1} parent=1 // pred_region
      %36 = dma.done [#allocation9], 1024
    $region13: #{tpu_custom_call.1} parent=1 // pred_fallthru
      _
    // Predicated region
    $region14: #{tpu_custom_call.1} parent=1 // pred_check
      _
    $region15: #{tpu_custom_call.1} parent=1 // pred_check_branch
      %38 = sbr.rel (0) target = $region17
    $region16: #{tpu_custom_call.1} parent=1 // pred_region
      %39 = dma.done [#allocation12], 1024
    $region17: #{tpu_custom_call.1} parent=1 // pred_fallthru
      _
    %p41 = scmp.eq.s32.totalorder 0, 0
    %p42 = scmp.eq.s32.totalorder 0, 0
    %p43 = pnand %p41, %p42
    %p44 = pneg %p43
    // Predicated region
    $region18: #{tpu_custom_call.1} parent=1 // pred_check
      _
    $region19: #{tpu_custom_call.1} parent=1 // pred_check_branch
      %46 = sbr.rel (%p43) target = $region21
    $region20: #{tpu_custom_call.1} parent=1 // pred_region
      %47 = vst [vmem:[#allocation4] sm:$0x1] 0.0
      %48 = vst [vmem:[#allocation5] sm:$0x1] 0.0
      %vm49 = vcmask 0
      %50 = vst.msk [vmem:[#allocation6] sm:$0x1] %vm49, 0.0
      %51 = vst.msk [vmem:[#allocation7] sm:$0x1] %vm49, 0.0
    $region21: #{tpu_custom_call.1} parent=1 // pred_fallthru
      _
    // Predicated region
    $region22: #{tpu_custom_call.1} parent=1 // pred_check
      %p52 = pneg %p42
    $region23: #{tpu_custom_call.1} parent=1 // pred_check_branch
      %54 = sbr.rel (%p52) target = $region25
    $region24: #{tpu_custom_call.1} parent=1 // pred_region
      %vm55 = vcmask 7168
      %56 = vst.msk [vmem:[#allocation2] sm:$0xff] %vm55, 0.0
      %57 = vst.msk [vmem:[#allocation2 + $0x8] sm:$0xff] %vm55, 0.0
      %58 = vst.msk [vmem:[#allocation2 + $0x10] sm:$0xff] %vm55, 0.0
      %59 = vst.msk [vmem:[#allocation2 + $0x18] sm:$0xff] %vm55, 0.0
      %60 = vst.msk [vmem:[#allocation2 + $0x20] sm:$0xff] %vm55, 0.0
      %61 = vst.msk [vmem:[#allocation2 + $0x28] sm:$0xff] %vm55, 0.0
      %62 = vst.msk [vmem:[#allocation2 + $0x30] sm:$0xff] %vm55, 0.0
      %63 = vst.msk [vmem:[#allocation2 + $0x38] sm:$0xff] %vm55, 0.0
      %64 = vst.msk [vmem:[#allocation2 + $0x40] sm:$0xff] %vm55, 0.0
      %65 = vst.msk [vmem:[#allocation2 + $0x48] sm:$0xff] %vm55, 0.0
      %66 = vst.msk [vmem:[#allocation2 + $0x50] sm:$0xff] %vm55, 0.0
      %67 = vst.msk [vmem:[#allocation2 + $0x58] sm:$0xff] %vm55, 0.0
      %68 = vst.msk [vmem:[#allocation2 + $0x60] sm:$0xff] %vm55, 0.0
      %69 = vst.msk [vmem:[#allocation2 + $0x68] sm:$0xff] %vm55, 0.0
      %70 = vst.msk [vmem:[#allocation2 + $0x70] sm:$0xff] %vm55, 0.0
      %71 = vst.msk [vmem:[#allocation2 + $0x78] sm:$0xff] %vm55, 0.0
      %72 = vst.msk [vmem:[#allocation3] sm:$0xff] %vm55, 0.0
      %73 = vst.msk [vmem:[#allocation3 + $0x8] sm:$0xff] %vm55, 0.0
      %74 = vst.msk [vmem:[#allocation3 + $0x10] sm:$0xff] %vm55, 0.0
      %75 = vst.msk [vmem:[#allocation3 + $0x18] sm:$0xff] %vm55, 0.0
      %76 = vst.msk [vmem:[#allocation3 + $0x20] sm:$0xff] %vm55, 0.0
      %77 = vst.msk [vmem:[#allocation3 + $0x28] sm:$0xff] %vm55, 0.0
      %78 = vst.msk [vmem:[#allocation3 + $0x30] sm:$0xff] %vm55, 0.0
      %79 = vst.msk [vmem:[#allocation3 + $0x38] sm:$0xff] %vm55, 0.0
      %80 = vst.msk [vmem:[#allocation3 + $0x40] sm:$0xff] %vm55, 0.0
      %81 = vst.msk [vmem:[#allocation3 + $0x48] sm:$0xff] %vm55, 0.0
      %82 = vst.msk [vmem:[#allocation3 + $0x50] sm:$0xff] %vm55, 0.0
      %83 = vst.msk [vmem:[#allocation3 + $0x58] sm:$0xff] %vm55, 0.0
      %84 = vst.msk [vmem:[#allocation3 + $0x60] sm:$0xff] %vm55, 0.0
      %85 = vst.msk [vmem:[#allocation3 + $0x68] sm:$0xff] %vm55, 0.0
      %86 = vst.msk [vmem:[#allocation3 + $0x70] sm:$0xff] %vm55, 0.0
      %87 = vst.msk [vmem:[#allocation3 + $0x78] sm:$0xff] %vm55, 0.0
    $region25: #{tpu_custom_call.1} parent=1 // pred_fallthru
      _
    %v88 = vld [vmem:[#allocation8] sm:$0xf]
    %v89 = vld [vmem:[#allocation8 + $0x4] sm:$0xf]
    %v90 = vld [vmem:[#allocation8 + $0x8] sm:$0xf]
    %v91 = vld [vmem:[#allocation8 + $0xc] sm:$0xf]
    %v92 = vld [vmem:[#allocation8 + $0x10] sm:$0xf]
    %v93 = vld [vmem:[#allocation8 + $0x14] sm:$0xf]
    %v94 = vld [vmem:[#allocation8 + $0x18] sm:$0xf]
    %v95 = vld [vmem:[#allocation8 + $0x1c] sm:$0xf]
    %v96 = vld [vmem:[#allocation8 + $0x20] sm:$0xf]
    %v97 = vld [vmem:[#allocation8 + $0x24] sm:$0xf]
    %v98 = vld [vmem:[#allocation8 + $0x28] sm:$0xf]
    %v99 = vld [vmem:[#allocation8 + $0x2c] sm:$0xf]
    %v100 = vld [vmem:[#allocation8 + $0x30] sm:$0xf]
    %v101 = vld [vmem:[#allocation8 + $0x34] sm:$0xf]
    %v102 = vld [vmem:[#allocation8 + $0x38] sm:$0xf]
    %v103 = vld [vmem:[#allocation8 + $0x3c] sm:$0xf]
    %v104 = vld [vmem:[#allocation11] sm:$0xf]
    %v105 = vld [vmem:[#allocation11 + $0x4] sm:$0xf]
    %v106 = vld [vmem:[#allocation11 + $0x8] sm:$0xf]
    %v107 = vld [vmem:[#allocation11 + $0xc] sm:$0xf]
    %v108 = vld [vmem:[#allocation11 + $0x10] sm:$0xf]
    %v109 = vld [vmem:[#allocation11 + $0x14] sm:$0xf]
    %v110 = vld [vmem:[#allocation11 + $0x18] sm:$0xf]
    %v111 = vld [vmem:[#allocation11 + $0x1c] sm:$0xf]
    %v112 = vld [vmem:[#allocation11 + $0x20] sm:$0xf]
    %v113 = vld [vmem:[#allocation11 + $0x24] sm:$0xf]
    %v114 = vld [vmem:[#allocation11 + $0x28] sm:$0xf]
    %v115 = vld [vmem:[#allocation11 + $0x2c] sm:$0xf]
    %v116 = vld [vmem:[#allocation11 + $0x30] sm:$0xf]
    %v117 = vld [vmem:[#allocation11 + $0x34] sm:$0xf]
    %v118 = vld [vmem:[#allocation11 + $0x38] sm:$0xf]
    %v119 = vld [vmem:[#allocation11 + $0x3c] sm:$0xf]
    %v136 = vunpack.c.l.b16 %v88
    %v137 = vunpack.c.l.b16 %v89
    %v138 = vunpack.c.l.b16 %v90
    %v139 = vunpack.c.l.b16 %v91
    %v140 = vunpack.c.l.b16 %v92
    %v141 = vunpack.c.l.b16 %v93
    %v142 = vunpack.c.l.b16 %v94
    %v143 = vunpack.c.l.b16 %v95
    %v144 = vunpack.c.l.b16 %v96
    %v145 = vunpack.c.l.b16 %v97
    %v146 = vunpack.c.l.b16 %v98
    %v147 = vunpack.c.l.b16 %v99
    %v148 = vunpack.c.l.b16 %v100
    %v149 = vunpack.c.l.b16 %v101
    %v150 = vunpack.c.l.b16 %v102
    %v151 = vunpack.c.l.b16 %v103
    %v152 = vpack.c.b16 %v137, %v136
    %v153 = vpack.c.b16 %v139, %v138
    %v154 = vpack.c.b16 %v141, %v140
    %v155 = vpack.c.b16 %v143, %v142
    %v156 = vpack.c.b16 %v145, %v144
    %v157 = vpack.c.b16 %v147, %v146
    %v158 = vpack.c.b16 %v149, %v148
    %v159 = vpack.c.b16 %v151, %v150
    %v184 = vunpack.c.l.b16 %v104
    %v185 = vunpack.c.l.b16 %v105
    %v186 = vunpack.c.l.b16 %v106
    %v187 = vunpack.c.l.b16 %v107
    %v188 = vunpack.c.l.b16 %v108
    %v189 = vunpack.c.l.b16 %v109
    %v190 = vunpack.c.l.b16 %v110
    %v191 = vunpack.c.l.b16 %v111
    %v192 = vunpack.c.l.b16 %v112
    %v193 = vunpack.c.l.b16 %v113
    %v194 = vunpack.c.l.b16 %v114
    %v195 = vunpack.c.l.b16 %v115
    %v196 = vunpack.c.l.b16 %v116
    %v197 = vunpack.c.l.b16 %v117
    %v198 = vunpack.c.l.b16 %v118
    %v199 = vunpack.c.l.b16 %v119
    %v200 = vpack.c.b16 %v185, %v184
    %v201 = vpack.c.b16 %v187, %v186
    %v202 = vpack.c.b16 %v189, %v188
    %v203 = vpack.c.b16 %v191, %v190
    %v204 = vpack.c.b16 %v193, %v192
    %v205 = vpack.c.b16 %v195, %v194
    %v206 = vpack.c.b16 %v197, %v196
    %v207 = vpack.c.b16 %v199, %v198
    %216 = vmatprep.subr.bf16.mxu0 0
    %217 = vmatpush1.bf16.xpose.msra.mxu0 %v200
    %218 = vmatprep.subr.bf16.mxu0 0
    %219 = vmatpush1.bf16.xpose.msra.mxu0 %v201
    %220 = vmatprep.subr.bf16.mxu0 0
    %221 = vmatpush1.bf16.xpose.msra.mxu0 %v202
    %222 = vmatprep.subr.bf16.mxu0 0
    %223 = vmatpush1.bf16.xpose.msra.mxu0 %v203
    %224 = vmatprep.subr.bf16.mxu0 0
    %225 = vmatpush1.bf16.xpose.msra.mxu0 %v204
    %226 = vmatprep.subr.bf16.mxu0 0
    %227 = vmatpush1.bf16.xpose.msra.mxu0 %v205
    %228 = vmatprep.subr.bf16.mxu0 0
    %229 = vmatpush1.bf16.xpose.msra.mxu0 %v206
    %230 = vmatprep.subr.bf16.mxu0 0
    %231 = vmatpush1.bf16.xpose.msra.mxu0 %v207
    %232 = vmatprep.subr.bf16.mxu0 0
    %233 = vmatpush1.bf16.xpose.msra.mxu0 0
    %234 = vmatprep.subr.bf16.mxu0 0
    %235 = vmatpush1.bf16.xpose.msra.mxu0 0
    %236 = vmatprep.subr.bf16.mxu0 0
    %237 = vmatpush1.bf16.xpose.msra.mxu0 0
    %238 = vmatprep.subr.bf16.mxu0 0
    %239 = vmatpush1.bf16.xpose.msra.mxu0 0
    %240 = vmatprep.subr.bf16.mxu0 0
    %241 = vmatpush1.bf16.xpose.msra.mxu0 0
    %242 = vmatprep.subr.bf16.mxu0 0
    %243 = vmatpush1.bf16.xpose.msra.mxu0 0
    %244 = vmatprep.subr.bf16.mxu0 0
    %245 = vmatpush1.bf16.xpose.msra.mxu0 0
    %246 = vmatprep.subr.bf16.mxu0 0
    %247 = vmatpush1.bf16.xpose.msra.mxu0 0
    %248 = vmatprep.mubr.bf16.mxu0 0
    %249 = vmatmul.mubr.bf16.gmra.mrb[0].mxu0 %v152
    %v250 = vpop.f32.mrb[0].mxu0
    %v251 = vadd.f32 0.0, %v250
    %v252 = vpop.f32.mrb[0].mxu0
    %v253 = vpop.f32.mrb[0].mxu0
    %v254 = vadd.f32 0.0, %v253
    %v255 = vpop.f32.mrb[0].mxu0
    %256 = vmatprep.mubr.bf16.mxu0 0
    %257 = vmatmul.mubr.bf16.gmra.mrb[0].mxu0 %v153
    %v258 = vpop.f32.mrb[0].mxu0
    %v259 = vadd.f32 0.0, %v258
    %v260 = vpop.f32.mrb[0].mxu0
    %v261 = vpop.f32.mrb[0].mxu0
    %v262 = vadd.f32 0.0, %v261
    %v263 = vpop.f32.mrb[0].mxu0
    %264 = vmatprep.mubr.bf16.mxu0 0
    %265 = vmatmul.mubr.bf16.gmra.mrb[0].mxu0 %v154
    %v266 = vpop.f32.mrb[0].mxu0
    %v267 = vadd.f32 0.0, %v266
    %v268 = vpop.f32.mrb[0].mxu0
    %v269 = vpop.f32.mrb[0].mxu0
    %v270 = vadd.f32 0.0, %v269
    %v271 = vpop.f32.mrb[0].mxu0
    %272 = vmatprep.mubr.bf16.mxu0 0
    %273 = vmatmul.mubr.bf16.gmra.mrb[0].mxu0 %v155
    %v274 = vpop.f32.mrb[0].mxu0
    %v275 = vadd.f32 0.0, %v274
    %v276 = vpop.f32.mrb[0].mxu0
    %v277 = vpop.f32.mrb[0].mxu0
    %v278 = vadd.f32 0.0, %v277
    %v279 = vpop.f32.mrb[0].mxu0
    %280 = vmatprep.mubr.bf16.mxu0 0
    %281 = vmatmul.mubr.bf16.gmra.mrb[0].mxu0 %v156
    %v282 = vpop.f32.mrb[0].mxu0
    %v283 = vadd.f32 0.0, %v282
    %v284 = vpop.f32.mrb[0].mxu0
    %v285 = vpop.f32.mrb[0].mxu0
    %v286 = vadd.f32 0.0, %v285
    %v287 = vpop.f32.mrb[0].mxu0
    %288 = vmatprep.mubr.bf16.mxu0 0
    %289 = vmatmul.mubr.bf16.gmra.mrb[0].mxu0 %v157
    %v290 = vpop.f32.mrb[0].mxu0
    %v291 = vadd.f32 0.0, %v290
    %v292 = vpop.f32.mrb[0].mxu0
    %v293 = vpop.f32.mrb[0].mxu0
    %v294 = vadd.f32 0.0, %v293
    %v295 = vpop.f32.mrb[0].mxu0
    %296 = vmatprep.mubr.bf16.mxu0 0
    %297 = vmatmul.mubr.bf16.gmra.mrb[0].mxu0 %v158
    %v298 = vpop.f32.mrb[0].mxu0
    %v299 = vadd.f32 0.0, %v298
    %v300 = vpop.f32.mrb[0].mxu0
    %v301 = vpop.f32.mrb[0].mxu0
    %v302 = vadd.f32 0.0, %v301
    %v303 = vpop.f32.mrb[0].mxu0
    %304 = vmatprep.mubr.bf16.mxu0 0
    %305 = vmatmul.mubr.bf16.gmra.mrb[0].mxu0 %v159
    %v306 = vpop.f32.mrb[0].mxu0
    %v307 = vadd.f32 0.0, %v306
    %v308 = vpop.f32.mrb[0].mxu0
    %v309 = vpop.f32.mrb[0].mxu0
    %v310 = vadd.f32 0.0, %v309
    %v311 = vpop.f32.mrb[0].mxu0
    %312 = vdwg.mxu0
    %s313 = smul.u32 0, 128
    %v314 = vlaneseq
    %v315 = vshrl.u32 %v314, 7
    %v316 = vadd.s32 %v315, 8
    %v317 = vadd.s32 %v315, 16
    %v318 = vadd.s32 %v315, 24
    %v319 = vadd.s32 %v315, 32
    %v320 = vadd.s32 %v315, 40
    %v321 = vadd.s32 %v315, 48
    %v322 = vadd.s32 %v315, 56
    %v323 = vadd.s32 %v315, 64
    %v324 = vadd.s32 %v315, 72
    %v325 = vadd.s32 %v315, 80
    %v326 = vadd.s32 %v315, 88
    %v327 = vadd.s32 %v315, 96
    %v328 = vadd.s32 %v315, 104
    %v329 = vadd.s32 %v315, 112
    %v330 = vadd.s32 %v315, 120
    %v331 = vstv %s313
    %v332 = vadd.s32 %v331, %v315
    %v333 = vadd.s32 %v331, %v316
    %v334 = vadd.s32 %v331, %v317
    %v335 = vadd.s32 %v331, %v318
    %v336 = vadd.s32 %v331, %v319
    %v337 = vadd.s32 %v331, %v320
    %v338 = vadd.s32 %v331, %v321
    %v339 = vadd.s32 %v331, %v322
    %v340 = vadd.s32 %v331, %v323
    %v341 = vadd.s32 %v331, %v324
    %v342 = vadd.s32 %v331, %v325
    %v343 = vadd.s32 %v331, %v326
    %v344 = vadd.s32 %v331, %v327
    %v345 = vadd.s32 %v331, %v328
    %v346 = vadd.s32 %v331, %v329
    %v347 = vadd.s32 %v331, %v330
    %s348 = smul.u32 0, 128
    %v349 = vlaneseq
    %v350 = vand.u32 %v349, 127
    %v351 = vstv %s348
    %v352 = vadd.s32 %v351, %v350
    %vm353 = vcmp.eq.s32.totalorder %v332, %v352
    %vm354 = vcmp.eq.s32.totalorder %v333, %v352
    %vm355 = vcmp.eq.s32.totalorder %v334, %v352
    %vm356 = vcmp.eq.s32.totalorder %v335, %v352
    %vm357 = vcmp.eq.s32.totalorder %v336, %v352
    %vm358 = vcmp.eq.s32.totalorder %v337, %v352
    %vm359 = vcmp.eq.s32.totalorder %v338, %v352
    %vm360 = vcmp.eq.s32.totalorder %v339, %v352
    %vm361 = vcmp.eq.s32.totalorder %v340, %v352
    %vm362 = vcmp.eq.s32.totalorder %v341, %v352
    %vm363 = vcmp.eq.s32.totalorder %v342, %v352
    %vm364 = vcmp.eq.s32.totalorder %v343, %v352
    %vm365 = vcmp.eq.s32.totalorder %v344, %v352
    %vm366 = vcmp.eq.s32.totalorder %v345, %v352
    %vm367 = vcmp.eq.s32.totalorder %v346, %v352
    %vm368 = vcmp.eq.s32.totalorder %v347, %v352
    %v369 = vsub.f32 %v251, 10.0
    %v370 = vsub.f32 %v254, 10.0
    %v371 = vsub.f32 %v259, 10.0
    %v372 = vsub.f32 %v262, 10.0
    %v373 = vsub.f32 %v267, 10.0
    %v374 = vsub.f32 %v270, 10.0
    %v375 = vsub.f32 %v275, 10.0
    %v376 = vsub.f32 %v278, 10.0
    %v377 = vsub.f32 %v283, 10.0
    %v378 = vsub.f32 %v286, 10.0
    %v379 = vsub.f32 %v291, 10.0
    %v380 = vsub.f32 %v294, 10.0
    %v381 = vsub.f32 %v299, 10.0
    %v382 = vsub.f32 %v302, 10.0
    %v383 = vsub.f32 %v307, 10.0
    %v384 = vsub.f32 %v310, 10.0
    %v385 = vmul.f32 %v369, 1.442695
    %v386 = vpow.pop %v385
    %v387 = vmul.f32 %v370, 1.442695
    %v388 = vpow.pop %v387
    %v389 = vmul.f32 %v371, 1.442695
    %v390 = vpow.pop %v389
    %v391 = vmul.f32 %v372, 1.442695
    %v392 = vpow.pop %v391
    %v393 = vmul.f32 %v373, 1.442695
    %v394 = vpow.pop %v393
    %v395 = vmul.f32 %v374, 1.442695
    %v396 = vpow.pop %v395
    %v397 = vmul.f32 %v375, 1.442695
    %v398 = vpow.pop %v397
    %v399 = vmul.f32 %v376, 1.442695
    %v400 = vpow.pop %v399
    %v401 = vmul.f32 %v377, 1.442695
    %v402 = vpow.pop %v401
    %v403 = vmul.f32 %v378, 1.442695
    %v404 = vpow.pop %v403
    %v405 = vmul.f32 %v379, 1.442695
    %v406 = vpow.pop %v405
    %v407 = vmul.f32 %v380, 1.442695
    %v408 = vpow.pop %v407
    %v409 = vmul.f32 %v381, 1.442695
    %v410 = vpow.pop %v409
    %v411 = vmul.f32 %v382, 1.442695
    %v412 = vpow.pop %v411
    %v413 = vmul.f32 %v383, 1.442695
    %v414 = vpow.pop %v413
    %v415 = vmul.f32 %v384, 1.442695
    %v416 = vpow.pop %v415
    %vm417 = vcmp.lt.s32.totalorder %v332, 8
    %vm418 = vcmp.lt.s32.totalorder %v333, 8
    %vm419 = vcmp.lt.s32.totalorder %v334, 8
    %vm420 = vcmp.lt.s32.totalorder %v335, 8
    %vm421 = vcmp.lt.s32.totalorder %v336, 8
    %vm422 = vcmp.lt.s32.totalorder %v337, 8
    %vm423 = vcmp.lt.s32.totalorder %v338, 8
    %vm424 = vcmp.lt.s32.totalorder %v339, 8
    %vm425 = vcmp.lt.s32.totalorder %v340, 8
    %vm426 = vcmp.lt.s32.totalorder %v341, 8
    %vm427 = vcmp.lt.s32.totalorder %v342, 8
    %vm428 = vcmp.lt.s32.totalorder %v343, 8
    %vm429 = vcmp.lt.s32.totalorder %v344, 8
    %vm430 = vcmp.lt.s32.totalorder %v345, 8
    %vm431 = vcmp.lt.s32.totalorder %v346, 8
    %vm432 = vcmp.lt.s32.totalorder %v347, 8
    %vm433 = vcmp.lt.s32.totalorder %v352, 8
    %vm434 = vmand %vm417, %vm433
    %vm435 = vmand %vm418, %vm433
    %vm436 = vmand %vm419, %vm433
    %vm437 = vmand %vm420, %vm433
    %vm438 = vmand %vm421, %vm433
    %vm439 = vmand %vm422, %vm433
    %vm440 = vmand %vm423, %vm433
    %vm441 = vmand %vm424, %vm433
    %vm442 = vmand %vm425, %vm433
    %vm443 = vmand %vm426, %vm433
    %vm444 = vmand %vm427, %vm433
    %vm445 = vmand %vm428, %vm433
    %vm446 = vmand %vm429, %vm433
    %vm447 = vmand %vm430, %vm433
    %vm448 = vmand %vm431, %vm433
    %vm449 = vmand %vm432, %vm433
    %vm450 = vmand %vm353, %vm434
    %vm451 = vmand %vm354, %vm435
    %vm452 = vmand %vm355, %vm436
    %vm453 = vmand %vm356, %vm437
    %vm454 = vmand %vm357, %vm438
    %vm455 = vmand %vm358, %vm439
    %vm456 = vmand %vm359, %vm440
    %vm457 = vmand %vm360, %vm441
    %vm458 = vmand %vm361, %vm442
    %vm459 = vmand %vm362, %vm443
    %vm460 = vmand %vm363, %vm444
    %vm461 = vmand %vm364, %vm445
    %vm462 = vmand %vm365, %vm446
    %vm463 = vmand %vm366, %vm447
    %vm464 = vmand %vm367, %vm448
    %vm465 = vmand %vm368, %vm449
    %v466 = vsel %vm434, %v386, 0.0
    %v467 = vsel %vm435, %v388, 0.0
    %v468 = vsel %vm436, %v390, 0.0
    %v469 = vsel %vm437, %v392, 0.0
    %v470 = vsel %vm438, %v394, 0.0
    %v471 = vsel %vm439, %v396, 0.0
    %v472 = vsel %vm440, %v398, 0.0
    %v473 = vsel %vm441, %v400, 0.0
    %v474 = vsel %vm442, %v402, 0.0
    %v475 = vsel %vm443, %v404, 0.0
    %v476 = vsel %vm444, %v406, 0.0
    %v477 = vsel %vm445, %v408, 0.0
    %v478 = vsel %vm446, %v410, 0.0
    %v479 = vsel %vm447, %v412, 0.0
    %v480 = vsel %vm448, %v414, 0.0
    %v481 = vsel %vm449, %v416, 0.0
    %v482 = vsel %vm450, 1, 0
    %v483 = vsel %vm451, 1, 0
    %v484 = vsel %vm452, 1, 0
    %v485 = vsel %vm453, 1, 0
    %v486 = vsel %vm454, 1, 0
    %v487 = vsel %vm455, 1, 0
    %v488 = vsel %vm456, 1, 0
    %v489 = vsel %vm457, 1, 0
    %v490 = vsel %vm458, 1, 0
    %v491 = vsel %vm459, 1, 0
    %v492 = vsel %vm460, 1, 0
    %v493 = vsel %vm461, 1, 0
    %v494 = vsel %vm462, 1, 0
    %v495 = vsel %vm463, 1, 0
    %v496 = vsel %vm464, 1, 0
    %v497 = vsel %vm465, 1, 0
    %v498 = vcvt.s32.f32 %v482
    %v499 = vcvt.s32.f32 %v483
    %v500 = vcvt.s32.f32 %v484
    %v501 = vcvt.s32.f32 %v485
    %v502 = vcvt.s32.f32 %v486
    %v503 = vcvt.s32.f32 %v487
    %v504 = vcvt.s32.f32 %v488
    %v505 = vcvt.s32.f32 %v489
    %v506 = vcvt.s32.f32 %v490
    %v507 = vcvt.s32.f32 %v491
    %v508 = vcvt.s32.f32 %v492
    %v509 = vcvt.s32.f32 %v493
    %v510 = vcvt.s32.f32 %v494
    %v511 = vcvt.s32.f32 %v495
    %v512 = vcvt.s32.f32 %v496
    %v513 = vcvt.s32.f32 %v497
    %v514 = vld [vmem:[#allocation2] sm:$0xff]
    %v515 = vld [vmem:[#allocation2 + $0x8] sm:$0xff]
    %v516 = vld [vmem:[#allocation2 + $0x10] sm:$0xff]
    %v517 = vld [vmem:[#allocation2 + $0x18] sm:$0xff]
    %v518 = vld [vmem:[#allocation2 + $0x20] sm:$0xff]
    %v519 = vld [vmem:[#allocation2 + $0x28] sm:$0xff]
    %v520 = vld [vmem:[#allocation2 + $0x30] sm:$0xff]
    %v521 = vld [vmem:[#allocation2 + $0x38] sm:$0xff]
    %v522 = vld [vmem:[#allocation2 + $0x40] sm:$0xff]
    %v523 = vld [vmem:[#allocation2 + $0x48] sm:$0xff]
    %v524 = vld [vmem:[#allocation2 + $0x50] sm:$0xff]
    %v525 = vld [vmem:[#allocation2 + $0x58] sm:$0xff]
    %v526 = vld [vmem:[#allocation2 + $0x60] sm:$0xff]
    %v527 = vld [vmem:[#allocation2 + $0x68] sm:$0xff]
    %v528 = vld [vmem:[#allocation2 + $0x70] sm:$0xff]
    %v529 = vld [vmem:[#allocation2 + $0x78] sm:$0xff]
    %530 = vadd.xlane.f32.xlu0 %v466
    %v531 = vpop.xlane.xlu0 %530
    %532 = vadd.xlane.f32.xlu0 %v467
    %v533 = vpop.xlane.xlu0 %532
    %534 = vadd.xlane.f32.xlu0 %v468
    %v535 = vpop.xlane.xlu0 %534
    %536 = vadd.xlane.f32.xlu0 %v469
    %v537 = vpop.xlane.xlu0 %536
    %538 = vadd.xlane.f32.xlu0 %v470
    %v539 = vpop.xlane.xlu0 %538
    %540 = vadd.xlane.f32.xlu0 %v471
    %v541 = vpop.xlane.xlu0 %540
    %542 = vadd.xlane.f32.xlu0 %v472
    %v543 = vpop.xlane.xlu0 %542
    %544 = vadd.xlane.f32.xlu0 %v473
    %v545 = vpop.xlane.xlu0 %544
    %546 = vadd.xlane.f32.xlu0 %v474
    %v547 = vpop.xlane.xlu0 %546
    %548 = vadd.xlane.f32.xlu0 %v475
    %v549 = vpop.xlane.xlu0 %548
    %550 = vadd.xlane.f32.xlu0 %v476
    %v551 = vpop.xlane.xlu0 %550
    %552 = vadd.xlane.f32.xlu0 %v477
    %v553 = vpop.xlane.xlu0 %552
    %554 = vadd.xlane.f32.xlu0 %v478
    %v555 = vpop.xlane.xlu0 %554
    %556 = vadd.xlane.f32.xlu0 %v479
    %v557 = vpop.xlane.xlu0 %556
    %558 = vadd.xlane.f32.xlu0 %v480
    %v559 = vpop.xlane.xlu0 %558
    %560 = vadd.xlane.f32.xlu0 %v481
    %v561 = vpop.xlane.xlu0 %560
    %v562 = vadd.f32 %v514, %v531
    %v563 = vadd.f32 %v515, %v533
    %v564 = vadd.f32 %v516, %v535
    %v565 = vadd.f32 %v517, %v537
    %v566 = vadd.f32 %v518, %v539
    %v567 = vadd.f32 %v519, %v541
    %v568 = vadd.f32 %v520, %v543
    %v569 = vadd.f32 %v521, %v545
    %v570 = vadd.f32 %v522, %v547
    %v571 = vadd.f32 %v523, %v549
    %v572 = vadd.f32 %v524, %v551
    %v573 = vadd.f32 %v525, %v553
    %v574 = vadd.f32 %v526, %v555
    %v575 = vadd.f32 %v527, %v557
    %v576 = vadd.f32 %v528, %v559
    %v577 = vadd.f32 %v529, %v561
    %vm578 = vcmask 7168
    %579 = vst.msk [vmem:[#allocation2] sm:$0xff] %vm578, %v562
    %580 = vst.msk [vmem:[#allocation2 + $0x8] sm:$0xff] %vm578, %v563
    %581 = vst.msk [vmem:[#allocation2 + $0x10] sm:$0xff] %vm578, %v564
    %582 = vst.msk [vmem:[#allocation2 + $0x18] sm:$0xff] %vm578, %v565
    %583 = vst.msk [vmem:[#allocation2 + $0x20] sm:$0xff] %vm578, %v566
    %584 = vst.msk [vmem:[#allocation2 + $0x28] sm:$0xff] %vm578, %v567
    %585 = vst.msk [vmem:[#allocation2 + $0x30] sm:$0xff] %vm578, %v568
    %586 = vst.msk [vmem:[#allocation2 + $0x38] sm:$0xff] %vm578, %v569
    %587 = vst.msk [vmem:[#allocation2 + $0x40] sm:$0xff] %vm578, %v570
    %588 = vst.msk [vmem:[#allocation2 + $0x48] sm:$0xff] %vm578, %v571
    %589 = vst.msk [vmem:[#allocation2 + $0x50] sm:$0xff] %vm578, %v572
    %590 = vst.msk [vmem:[#allocation2 + $0x58] sm:$0xff] %vm578, %v573
    %591 = vst.msk [vmem:[#allocation2 + $0x60] sm:$0xff] %vm578, %v574
    %592 = vst.msk [vmem:[#allocation2 + $0x68] sm:$0xff] %vm578, %v575
    %593 = vst.msk [vmem:[#allocation2 + $0x70] sm:$0xff] %vm578, %v576
    %594 = vst.msk [vmem:[#allocation2 + $0x78] sm:$0xff] %vm578, %v577
    %v595 = vld [vmem:[#allocation3] sm:$0xff]
    %v596 = vld [vmem:[#allocation3 + $0x8] sm:$0xff]
    %v597 = vld [vmem:[#allocation3 + $0x10] sm:$0xff]
    %v598 = vld [vmem:[#allocation3 + $0x18] sm:$0xff]
    %v599 = vld [vmem:[#allocation3 + $0x20] sm:$0xff]
    %v600 = vld [vmem:[#allocation3 + $0x28] sm:$0xff]
    %v601 = vld [vmem:[#allocation3 + $0x30] sm:$0xff]
    %v602 = vld [vmem:[#allocation3 + $0x38] sm:$0xff]
    %v603 = vld [vmem:[#allocation3 + $0x40] sm:$0xff]
    %v604 = vld [vmem:[#allocation3 + $0x48] sm:$0xff]
    %v605 = vld [vmem:[#allocation3 + $0x50] sm:$0xff]
    %v606 = vld [vmem:[#allocation3 + $0x58] sm:$0xff]
    %v607 = vld [vmem:[#allocation3 + $0x60] sm:$0xff]
    %v608 = vld [vmem:[#allocation3 + $0x68] sm:$0xff]
    %v609 = vld [vmem:[#allocation3 + $0x70] sm:$0xff]
    %v610 = vld [vmem:[#allocation3 + $0x78] sm:$0xff]
    %611 = vadd.xlane.f32.xlu0 %v498
    %v612 = vpop.xlane.xlu0 %611
    %613 = vadd.xlane.f32.xlu0 %v499
    %v614 = vpop.xlane.xlu0 %613
    %615 = vadd.xlane.f32.xlu0 %v500
    %v616 = vpop.xlane.xlu0 %615
    %617 = vadd.xlane.f32.xlu0 %v501
    %v618 = vpop.xlane.xlu0 %617
    %619 = vadd.xlane.f32.xlu0 %v502
    %v620 = vpop.xlane.xlu0 %619
    %621 = vadd.xlane.f32.xlu0 %v503
    %v622 = vpop.xlane.xlu0 %621
    %623 = vadd.xlane.f32.xlu0 %v504
    %v624 = vpop.xlane.xlu0 %623
    %625 = vadd.xlane.f32.xlu0 %v505
    %v626 = vpop.xlane.xlu0 %625
    %627 = vadd.xlane.f32.xlu0 %v506
    %v628 = vpop.xlane.xlu0 %627
    %629 = vadd.xlane.f32.xlu0 %v507
    %v630 = vpop.xlane.xlu0 %629
    %631 = vadd.xlane.f32.xlu0 %v508
    %v632 = vpop.xlane.xlu0 %631
    %633 = vadd.xlane.f32.xlu0 %v509
    %v634 = vpop.xlane.xlu0 %633
    %635 = vadd.xlane.f32.xlu0 %v510
    %v636 = vpop.xlane.xlu0 %635
    %637 = vadd.xlane.f32.xlu0 %v511
    %v638 = vpop.xlane.xlu0 %637
    %639 = vadd.xlane.f32.xlu0 %v512
    %v640 = vpop.xlane.xlu0 %639
    %641 = vadd.xlane.f32.xlu0 %v513
    %v642 = vpop.xlane.xlu0 %641
    %v643 = vadd.f32 %v595, %v612
    %v644 = vadd.f32 %v596, %v614
    %v645 = vadd.f32 %v597, %v616
    %v646 = vadd.f32 %v598, %v618
    %v647 = vadd.f32 %v599, %v620
    %v648 = vadd.f32 %v600, %v622
    %v649 = vadd.f32 %v601, %v624
    %v650 = vadd.f32 %v602, %v626
    %v651 = vadd.f32 %v603, %v628
    %v652 = vadd.f32 %v604, %v630
    %v653 = vadd.f32 %v605, %v632
    %v654 = vadd.f32 %v606, %v634
    %v655 = vadd.f32 %v607, %v636
    %v656 = vadd.f32 %v608, %v638
    %v657 = vadd.f32 %v609, %v640
    %v658 = vadd.f32 %v610, %v642
    %659 = vst.msk [vmem:[#allocation3] sm:$0xff] %vm578, %v643
    %660 = vst.msk [vmem:[#allocation3 + $0x8] sm:$0xff] %vm578, %v644
    %661 = vst.msk [vmem:[#allocation3 + $0x10] sm:$0xff] %vm578, %v645
    %662 = vst.msk [vmem:[#allocation3 + $0x18] sm:$0xff] %vm578, %v646
    %663 = vst.msk [vmem:[#allocation3 + $0x20] sm:$0xff] %vm578, %v647
    %664 = vst.msk [vmem:[#allocation3 + $0x28] sm:$0xff] %vm578, %v648
    %665 = vst.msk [vmem:[#allocation3 + $0x30] sm:$0xff] %vm578, %v649
    %666 = vst.msk [vmem:[#allocation3 + $0x38] sm:$0xff] %vm578, %v650
    %667 = vst.msk [vmem:[#allocation3 + $0x40] sm:$0xff] %vm578, %v651
    %668 = vst.msk [vmem:[#allocation3 + $0x48] sm:$0xff] %vm578, %v652
    %669 = vst.msk [vmem:[#allocation3 + $0x50] sm:$0xff] %vm578, %v653
    %670 = vst.msk [vmem:[#allocation3 + $0x58] sm:$0xff] %vm578, %v654
    %671 = vst.msk [vmem:[#allocation3 + $0x60] sm:$0xff] %vm578, %v655
    %672 = vst.msk [vmem:[#allocation3 + $0x68] sm:$0xff] %vm578, %v656
    %673 = vst.msk [vmem:[#allocation3 + $0x70] sm:$0xff] %vm578, %v657
    %674 = vst.msk [vmem:[#allocation3 + $0x78] sm:$0xff] %vm578, %v658
    %v675 = vld [vmem:[#allocation4] sm:$0x1]
    %v676 = vadd.f32 %v466, %v467
    %v677 = vadd.f32 %v676, %v468
    %v678 = vadd.f32 %v677, %v469
    %v679 = vadd.f32 %v678, %v470
    %v680 = vadd.f32 %v679, %v471
    %v681 = vadd.f32 %v680, %v472
    %v682 = vadd.f32 %v681, %v473
    %v683 = vadd.f32 %v682, %v474
    %v684 = vadd.f32 %v683, %v475
    %v685 = vadd.f32 %v684, %v476
    %v686 = vadd.f32 %v685, %v477
    %v687 = vadd.f32 %v686, %v478
    %v688 = vadd.f32 %v687, %v479
    %v689 = vadd.f32 %v688, %v480
    %v690 = vadd.f32 %v689, %v481
    %v691 = vrot.slane %v690, 4
    %v692 = vadd.f32 %v690, %v691
    %v693 = vrot.slane %v692, 2
    %v694 = vadd.f32 %v692, %v693
    %v695 = vrot.slane %v694, 1
    %v696 = vadd.f32 %v694, %v695
    %v697 = vadd.f32 %v675, %v696
    %698 = vst [vmem:[#allocation4] sm:$0x1] %v697
    %v699 = vld [vmem:[#allocation5] sm:$0x1]
    %v700 = vadd.f32 %v498, %v499
    %v701 = vadd.f32 %v700, %v500
    %v702 = vadd.f32 %v701, %v501
    %v703 = vadd.f32 %v702, %v502
    %v704 = vadd.f32 %v703, %v503
    %v705 = vadd.f32 %v704, %v504
    %v706 = vadd.f32 %v705, %v505
    %v707 = vadd.f32 %v706, %v506
    %v708 = vadd.f32 %v707, %v507
    %v709 = vadd.f32 %v708, %v508
    %v710 = vadd.f32 %v709, %v509
    %v711 = vadd.f32 %v710, %v510
    %v712 = vadd.f32 %v711, %v511
    %v713 = vadd.f32 %v712, %v512
    %v714 = vadd.f32 %v713, %v513
    %v715 = vrot.slane %v714, 4
    %v716 = vadd.f32 %v714, %v715
    %v717 = vrot.slane %v716, 2
    %v718 = vadd.f32 %v716, %v717
    %v719 = vrot.slane %v718, 1
    %v720 = vadd.f32 %v718, %v719
    %v721 = vadd.f32 %v699, %v720
    %722 = vst [vmem:[#allocation5] sm:$0x1] %v721
    %v723 = vsel %vm450, %v251, 0.0
    %v724 = vsel %vm451, %v254, 0.0
    %v725 = vsel %vm452, %v259, 0.0
    %v726 = vsel %vm453, %v262, 0.0
    %v727 = vsel %vm454, %v267, 0.0
    %v728 = vsel %vm455, %v270, 0.0
    %v729 = vsel %vm456, %v275, 0.0
    %v730 = vsel %vm457, %v278, 0.0
    %v731 = vsel %vm458, %v283, 0.0
    %v732 = vsel %vm459, %v286, 0.0
    %v733 = vsel %vm460, %v291, 0.0
    %v734 = vsel %vm461, %v294, 0.0
    %v735 = vsel %vm462, %v299, 0.0
    %v736 = vsel %vm463, %v302, 0.0
    %v737 = vsel %vm464, %v307, 0.0
    %v738 = vsel %vm465, %v310, 0.0
    %739 = vadd.xlane.f32.xlu0 %v723
    %v740 = vpop.xlane.xlu0 %739
    %741 = vadd.xlane.f32.xlu0 %v724
    %v742 = vpop.xlane.xlu0 %741
    %743 = vadd.xlane.f32.xlu0 %v725
    %v744 = vpop.xlane.xlu0 %743
    %745 = vadd.xlane.f32.xlu0 %v726
    %v746 = vpop.xlane.xlu0 %745
    %747 = vadd.xlane.f32.xlu0 %v727
    %v748 = vpop.xlane.xlu0 %747
    %749 = vadd.xlane.f32.xlu0 %v728
    %v750 = vpop.xlane.xlu0 %749
    %751 = vadd.xlane.f32.xlu0 %v729
    %v752 = vpop.xlane.xlu0 %751
    %753 = vadd.xlane.f32.xlu0 %v730
    %v754 = vpop.xlane.xlu0 %753
    %755 = vadd.xlane.f32.xlu0 %v731
    %v756 = vpop.xlane.xlu0 %755
    %757 = vadd.xlane.f32.xlu0 %v732
    %v758 = vpop.xlane.xlu0 %757
    %759 = vadd.xlane.f32.xlu0 %v733
    %v760 = vpop.xlane.xlu0 %759
    %761 = vadd.xlane.f32.xlu0 %v734
    %v762 = vpop.xlane.xlu0 %761
    %763 = vadd.xlane.f32.xlu0 %v735
    %v764 = vpop.xlane.xlu0 %763
    %765 = vadd.xlane.f32.xlu0 %v736
    %v766 = vpop.xlane.xlu0 %765
    %767 = vadd.xlane.f32.xlu0 %v737
    %v768 = vpop.xlane.xlu0 %767
    %769 = vadd.xlane.f32.xlu0 %v738
    %v770 = vpop.xlane.xlu0 %769
    %v771 = vld [vmem:[#allocation6] sm:$0x1]
    %v772 = vadd.f32 %v740, %v742
    %v773 = vadd.f32 %v772, %v744
    %v774 = vadd.f32 %v773, %v746
    %v775 = vadd.f32 %v774, %v748
    %v776 = vadd.f32 %v775, %v750
    %v777 = vadd.f32 %v776, %v752
    %v778 = vadd.f32 %v777, %v754
    %v779 = vadd.f32 %v778, %v756
    %v780 = vadd.f32 %v779, %v758
    %v781 = vadd.f32 %v780, %v760
    %v782 = vadd.f32 %v781, %v762
    %v783 = vadd.f32 %v782, %v764
    %v784 = vadd.f32 %v783, %v766
    %v785 = vadd.f32 %v784, %v768
    %v786 = vadd.f32 %v785, %v770
    %v787 = vrot.slane %v786, 4
    %v788 = vadd.f32 %v786, %v787
    %v789 = vrot.slane %v788, 2
    %v790 = vadd.f32 %v788, %v789
    %v791 = vrot.slane %v790, 1
    %v792 = vadd.f32 %v790, %v791
    %v793 = vadd.f32 %v771, %v792
    %vm794 = vcmask 0
    %795 = vst.msk [vmem:[#allocation6] sm:$0x1] %vm794, %v793
    // Predicated region
    $region26: #{tpu_custom_call.1} parent=1 // pred_check
      %p796 = pneg %p42
    $region27: #{tpu_custom_call.1} parent=1 // pred_check_branch
      %798 = sbr.rel (%p796) target = $region29
    $region28: #{tpu_custom_call.1} parent=1 // pred_region
      %v799 = vld [vmem:[#allocation3] sm:$0xff]
      %v800 = vld [vmem:[#allocation3 + $0x8] sm:$0xff]
      %v801 = vld [vmem:[#allocation3 + $0x10] sm:$0xff]
      %v802 = vld [vmem:[#allocation3 + $0x18] sm:$0xff]
      %v803 = vld [vmem:[#allocation3 + $0x20] sm:$0xff]
      %v804 = vld [vmem:[#allocation3 + $0x28] sm:$0xff]
      %v805 = vld [vmem:[#allocation3 + $0x30] sm:$0xff]
      %v806 = vld [vmem:[#allocation3 + $0x38] sm:$0xff]
      %v807 = vld [vmem:[#allocation3 + $0x40] sm:$0xff]
      %v808 = vld [vmem:[#allocation3 + $0x48] sm:$0xff]
      %v809 = vld [vmem:[#allocation3 + $0x50] sm:$0xff]
      %v810 = vld [vmem:[#allocation3 + $0x58] sm:$0xff]
      %v811 = vld [vmem:[#allocation3 + $0x60] sm:$0xff]
      %v812 = vld [vmem:[#allocation3 + $0x68] sm:$0xff]
      %v813 = vld [vmem:[#allocation3 + $0x70] sm:$0xff]
      %v814 = vld [vmem:[#allocation3 + $0x78] sm:$0xff]
      %vm815 = vcmp.gt.f32.partialorder %v799, 0.0
      %vm816 = vcmp.gt.f32.partialorder %v800, 0.0
      %vm817 = vcmp.gt.f32.partialorder %v801, 0.0
      %vm818 = vcmp.gt.f32.partialorder %v802, 0.0
      %vm819 = vcmp.gt.f32.partialorder %v803, 0.0
      %vm820 = vcmp.gt.f32.partialorder %v804, 0.0
      %vm821 = vcmp.gt.f32.partialorder %v805, 0.0
      %vm822 = vcmp.gt.f32.partialorder %v806, 0.0
      %vm823 = vcmp.gt.f32.partialorder %v807, 0.0
      %vm824 = vcmp.gt.f32.partialorder %v808, 0.0
      %vm825 = vcmp.gt.f32.partialorder %v809, 0.0
      %vm826 = vcmp.gt.f32.partialorder %v810, 0.0
      %vm827 = vcmp.gt.f32.partialorder %v811, 0.0
      %vm828 = vcmp.gt.f32.partialorder %v812, 0.0
      %vm829 = vcmp.gt.f32.partialorder %v813, 0.0
      %vm830 = vcmp.gt.f32.partialorder %v814, 0.0
      %v831 = vld [vmem:[#allocation2] sm:$0xff]
      %v832 = vld [vmem:[#allocation2 + $0x8] sm:$0xff]
      %v833 = vld [vmem:[#allocation2 + $0x10] sm:$0xff]
      %v834 = vld [vmem:[#allocation2 + $0x18] sm:$0xff]
      %v835 = vld [vmem:[#allocation2 + $0x20] sm:$0xff]
      %v836 = vld [vmem:[#allocation2 + $0x28] sm:$0xff]
      %v837 = vld [vmem:[#allocation2 + $0x30] sm:$0xff]
      %v838 = vld [vmem:[#allocation2 + $0x38] sm:$0xff]
      %v839 = vld [vmem:[#allocation2 + $0x40] sm:$0xff]
      %v840 = vld [vmem:[#allocation2 + $0x48] sm:$0xff]
      %v841 = vld [vmem:[#allocation2 + $0x50] sm:$0xff]
      %v842 = vld [vmem:[#allocation2 + $0x58] sm:$0xff]
      %v843 = vld [vmem:[#allocation2 + $0x60] sm:$0xff]
      %v844 = vld [vmem:[#allocation2 + $0x68] sm:$0xff]
      %v845 = vld [vmem:[#allocation2 + $0x70] sm:$0xff]
      %v846 = vld [vmem:[#allocation2 + $0x78] sm:$0xff]
      %v847 = vsel %vm815, %v831, 1.0
      %v848 = vsel %vm816, %v832, 1.0
      %v849 = vsel %vm817, %v833, 1.0
      %v850 = vsel %vm818, %v834, 1.0
      %v851 = vsel %vm819, %v835, 1.0
      %v852 = vsel %vm820, %v836, 1.0
      %v853 = vsel %vm821, %v837, 1.0
      %v854 = vsel %vm822, %v838, 1.0
      %v855 = vsel %vm823, %v839, 1.0
      %v856 = vsel %vm824, %v840, 1.0
      %v857 = vsel %vm825, %v841, 1.0
      %v858 = vsel %vm826, %v842, 1.0
      %v859 = vsel %vm827, %v843, 1.0
      %v860 = vsel %vm828, %v844, 1.0
      %v861 = vsel %vm829, %v845, 1.0
      %v862 = vsel %vm830, %v846, 1.0
      %v863 = vld [vmem:[#allocation7] sm:$0x1]
      %v864 = vlog2.pop %v847
      %v865 = vmul.f32 %v864, 0.6931472
      %v866 = vlog2.pop %v848
      %v867 = vmul.f32 %v866, 0.6931472
      %v868 = vlog2.pop %v849
      %v869 = vmul.f32 %v868, 0.6931472
      %v870 = vlog2.pop %v850
      %v871 = vmul.f32 %v870, 0.6931472
      %v872 = vlog2.pop %v851
      %v873 = vmul.f32 %v872, 0.6931472
      %v874 = vlog2.pop %v852
      %v875 = vmul.f32 %v874, 0.6931472
      %v876 = vlog2.pop %v853
      %v877 = vmul.f32 %v876, 0.6931472
      %v878 = vlog2.pop %v854
      %v879 = vmul.f32 %v878, 0.6931472
      %v880 = vlog2.pop %v855
      %v881 = vmul.f32 %v880, 0.6931472
      %v882 = vlog2.pop %v856
      %v883 = vmul.f32 %v882, 0.6931472
      %v884 = vlog2.pop %v857
      %v885 = vmul.f32 %v884, 0.6931472
      %v886 = vlog2.pop %v858
      %v887 = vmul.f32 %v886, 0.6931472
      %v888 = vlog2.pop %v859
      %v889 = vmul.f32 %v888, 0.6931472
      %v890 = vlog2.pop %v860
      %v891 = vmul.f32 %v890, 0.6931472
      %v892 = vlog2.pop %v861
      %v893 = vmul.f32 %v892, 0.6931472
      %v894 = vlog2.pop %v862
      %v895 = vmul.f32 %v894, 0.6931472
      %v896 = vmul.f32 %v799, %v865
      %v897 = vmul.f32 %v800, %v867
      %v898 = vmul.f32 %v801, %v869
      %v899 = vmul.f32 %v802, %v871
      %v900 = vmul.f32 %v803, %v873
      %v901 = vmul.f32 %v804, %v875
      %v902 = vmul.f32 %v805, %v877
      %v903 = vmul.f32 %v806, %v879
      %v904 = vmul.f32 %v807, %v881
      %v905 = vmul.f32 %v808, %v883
      %v906 = vmul.f32 %v809, %v885
      %v907 = vmul.f32 %v810, %v887
      %v908 = vmul.f32 %v811, %v889
      %v909 = vmul.f32 %v812, %v891
      %v910 = vmul.f32 %v813, %v893
      %v911 = vmul.f32 %v814, %v895
      %v912 = vsel %vm578, %v896, 0.0
      %v913 = vsel %vm578, %v897, 0.0
      %v914 = vadd.f32 %v912, %v913
      %v915 = vsel %vm578, %v898, 0.0
      %v916 = vadd.f32 %v914, %v915
      %v917 = vsel %vm578, %v899, 0.0
      %v918 = vadd.f32 %v916, %v917
      %v919 = vsel %vm578, %v900, 0.0
      %v920 = vadd.f32 %v918, %v919
      %v921 = vsel %vm578, %v901, 0.0
      %v922 = vadd.f32 %v920, %v921
      %v923 = vsel %vm578, %v902, 0.0
      %v924 = vadd.f32 %v922, %v923
      %v925 = vsel %vm578, %v903, 0.0
      %v926 = vadd.f32 %v924, %v925
      %v927 = vsel %vm578, %v904, 0.0
      %v928 = vadd.f32 %v926, %v927
      %v929 = vsel %vm578, %v905, 0.0
      %v930 = vadd.f32 %v928, %v929
      %v931 = vsel %vm578, %v906, 0.0
      %v932 = vadd.f32 %v930, %v931
      %v933 = vsel %vm578, %v907, 0.0
      %v934 = vadd.f32 %v932, %v933
      %v935 = vsel %vm578, %v908, 0.0
      %v936 = vadd.f32 %v934, %v935
      %v937 = vsel %vm578, %v909, 0.0
      %v938 = vadd.f32 %v936, %v937
      %v939 = vsel %vm578, %v910, 0.0
      %v940 = vadd.f32 %v938, %v939
      %v941 = vsel %vm578, %v911, 0.0
      %v942 = vadd.f32 %v940, %v941
      %v943 = vrot.slane %v942, 4
      %v944 = vadd.f32 %v942, %v943
      %v945 = vrot.slane %v944, 2
      %v946 = vadd.f32 %v944, %v945
      %v947 = vrot.slane %v946, 1
      %v948 = vadd.f32 %v946, %v947
      %v949 = vadd.f32 %v863, %v948
      %950 = vst.msk [vmem:[#allocation7] sm:$0x1] %vm794, %v949
    $region29: #{tpu_custom_call.1} parent=1 // pred_fallthru
      _
    // Predicated region
    $region30: #{tpu_custom_call.1} parent=1 // pred_check
      _
    $region31: #{tpu_custom_call.1} parent=1 // pred_check_branch
      %952 = sbr.rel (%p43) target = $region33
    $region32: #{tpu_custom_call.1} parent=1 // pred_region
      %v953 = vld [vmem:[#allocation5] sm:$0x1]
      %vm954 = vcmp.gt.f32.partialorder %v953, 0.0
      %v955 = vld [vmem:[#allocation4] sm:$0x1]
      %v956 = vsel %vm954, %v955, 1.0
      %v957 = vlog2.pop %v956
      %v958 = vmul.f32 %v957, 0.6931472
      %v959 = vmul.f32 %v953, %v958
      %vm960 = vcmask 1040384
      %v961 = vsel %vm960, %v959, 0.0
      %962 = vadd.xlane.f32.xlu0 %v961
      %v963 = vpop.xlane.xlu0 %962
      %v964 = vadd.f32 %v963, 0.0
      %v965 = vsel %vm960, %v953, 0.0
      %966 = vadd.xlane.f32.xlu0 %v965
      %v967 = vpop.xlane.xlu0 %966
      %v968 = vadd.f32 %v967, 0.0
      %v969 = vrcp.pop %v968
      %v970 = vmul.f32 1.0, %v969
      %v971 = vld [vmem:[#allocation7] sm:$0x1]
      %v972 = vadd.f32 %v971, %v964
      %v973 = vmul.f32 %v970, 0.5
      %v974 = vmul.f32 %v972, %v973
      %v975 = vadd.f32 %v974, 10.0
      %v976 = vld [vmem:[#allocation6] sm:$0x1]
      %v977 = vmul.f32 %v976, %v970
      %v978 = vsub.f32 %v975, %v977
      %979 = vst.msk [vmem:[#allocation13] sm:$0x1] %vm794, %v978
    $region33: #{tpu_custom_call.1} parent=1 // pred_fallthru
      _
    // Predicated region
    $region34: #{tpu_custom_call.1} parent=1 // pred_check
      _
    $region35: #{tpu_custom_call.1} parent=1 // pred_check_branch
      %981 = sbr.rel (0) target = $region37
    $region36: #{tpu_custom_call.1} parent=1 // pred_region
      %s983 = ssub.s32 16, 16
      %984 = vsyncadd [#allocation10], %s983
      %s986 = sshll.u32 [#allocation13], 4
      %s987 = int_to_ptr.vmem [resolvable:$true] %s986
      %989 = dma.vmem_to_hbm [thread:$0]  %s987, 16, %s2, [#allocation10]
    $region37: #{tpu_custom_call.1} parent=1 // pred_fallthru
      _
    // Predicated region
    $region38: #{tpu_custom_call.1} parent=1 // pred_check
      _
    $region39: #{tpu_custom_call.1} parent=1 // pred_check_branch
      %991 = sbr.rel (0) target = $region41
    $region40: #{tpu_custom_call.1} parent=1 // pred_region
      %992 = dma.done [#allocation10], 16
    $region41: #{tpu_custom_call.1} parent=1 // pred_fallthru
      _
    %993 = vsyncpa [#allocation9], 1
    %994 = vsyncpa [#allocation12], 1
    %995 = vsyncpa [#allocation10], 1

</llo_original>
